<compile_context>
chip_gen: v6e
topology: v6e:2x2x1
jax: 0.10.0
libtpu: 0.0.40
codegen_flags: <defaults>
</compile_context>

<pallas_src>
import functools

import jax
import jax.numpy as jnp
from jax import lax
from jax.experimental import pallas as pl
from jax.experimental.pallas import tpu as pltpu


def _hidistance_kernel(margin, family_info, n_keys,
                       featq_ref, featk_ref, sqq_ref, sqk_ref,
                       binq_ref, bink_ref, labq_ref, labk_ref,
                       out_ref):
    xq = featq_ref[...]                                   # (TQ, D) f32
    xk = featk_ref[...]                                   # (B,  D) f32

    # gram[i, j] = <xq_i, xk_j>; contract dim 1 of both operands (no x.T).
    gram = lax.dot_general(xq, xk, (((1,), (1,)), ((), ())),
                           preferred_element_type=jnp.float32)     # (TQ, B)

    # squared euclidean distances from precomputed squared norms.
    dist = sqq_ref[...] + sqk_ref[...] - 2.0 * gram
    dist = jnp.maximum(dist, 1e-10)

    bin_q = binq_ref[...]                                  # (TQ, 1) in {0,1}
    bin_k = bink_ref[...]                                  # (1,  B)
    binary_mask_pre = (bin_q == bin_k).astype(jnp.float32)          # (TQ, B)

    # Row reductions shared by both branches.
    d_all = jnp.sum(dist, axis=1, keepdims=True)                    # (TQ, 1)
    d_bin = jnp.sum(binary_mask_pre * dist, axis=1, keepdims=True)  # (TQ, 1)
    c_bin = jnp.sum(binary_mask_pre, axis=1, keepdims=True)         # (TQ, 1)

    nb = jnp.float32(n_keys)

    if not family_info:
        # binary_negate_mask = 1 - binary_mask_pre (intentionally NOT
        # diag-masked, matching the reference).
        bn_cnt = nb - c_bin
        bn_d = d_all - d_bin
        # binary_mask is diag-masked in the reference: its diag value is 1 and
        # the dist diagonal is clamped to ~1e-10, so only the count needs -1.
        bm_cnt = c_bin - 1.0
        bm_d = d_bin
        separate_ben_mal = jnp.maximum(bn_cnt * margin - bn_d, 0.0)
        cluster_within_class = jnp.maximum(bm_d - bm_cnt * margin, 0.0)
        out_ref[...] = separate_ben_mal + cluster_within_class
    else:
        lab_q = labq_ref[...]                              # (TQ, 1)
        lab_k = labk_ref[...]                              # (1,  B)
        multi_mask_pre = (lab_q == lab_k).astype(jnp.float32)
        ben_q = 1.0 - bin_q
        ben_k = 1.0 - bin_k
        same_ben_pre = ben_q * ben_k                       # (TQ, B)

        d_multi = jnp.sum(multi_mask_pre * dist, axis=1, keepdims=True)
        d_sb = jnp.sum(same_ben_pre * dist, axis=1, keepdims=True)
        c_multi = jnp.sum(multi_mask_pre, axis=1, keepdims=True)
        c_sb = jnp.sum(same_ben_pre, axis=1, keepdims=True)

        # Diag-corrected counts (mask_pre diagonals: bin=1, multi=1,
        # same_ben=ben_q, other_mal=0, same_mal_fam=bin_q).
        sb_cnt = c_sb - ben_q
        om_cnt = c_bin - c_multi
        sf_cnt = c_multi - c_sb - bin_q
        bn_cnt = nb - c_bin

        # Masked distance sums by linearity (diag dist contribution ~1e-10).
        sum_same_ben = jnp.maximum(d_sb - sb_cnt * margin, 0.0)
        sum_other_mal = jnp.maximum((d_bin - d_multi) - om_cnt * margin, 0.0)
        sum_same_mal_fam = d_multi - d_sb
        sum_bin_neg = jnp.maximum(bn_cnt * (2.0 * margin) - (d_all - d_bin), 0.0)

        # Exact divisions on (TQ,1) columns (negligible cost; approx
        # reciprocal skipped to avoid precision risk on large loss values).
        sample_loss = (sum_same_ben / jnp.maximum(sb_cnt, 1.0)
                       + sum_other_mal / jnp.maximum(om_cnt, 1.0)
                       + sum_same_mal_fam / jnp.maximum(sf_cnt, 1.0)
                       + sum_bin_neg / jnp.maximum(bn_cnt, 1.0))
        out_ref[...] = sample_loss


def _pick_tile(batch, vmem_budget_bytes=40 * 1024 * 1024):
    """Largest query-tile that is a multiple of 8, divides batch and keeps
    ~8 live (TQ, B) f32 slabs under the VMEM budget (safe on v7x 64 MiB)."""
    if batch <= 256:
        return batch
    cap = max(8, vmem_budget_bytes // (batch * 4 * 8))
    cap = min(cap, 512)
    cap = (cap // 8) * 8
    for tq in range(cap, 7, -8):
        if batch % tq == 0:
            return tq
    return batch   # no even split found -> single full-row tile


def hi_distance_loss(features, binary_cat_labels, labels, margin=10.0,
                     family_info=False, tile=None):
    """reduce='mean', sample_reduce='mean', weight=None, split=None."""
    B, D = features.shape
    if labels.shape[0] != B:
        raise ValueError('Num of labels does not match num of features')

    x = features.astype(jnp.float32)
    sq = jnp.sum(x * x, axis=1, keepdims=True)             # (B, 1)
    bin_col = binary_cat_labels[:, 1].astype(jnp.float32).reshape(B, 1)
    lab_col = labels.astype(jnp.float32).reshape(B, 1)

    tq = _pick_tile(B) if tile is None else int(tile)
    if tq != B and (tq % 8 != 0 or B % tq != 0):
        raise ValueError(f'tile={tq} must be a multiple of 8 dividing batch={B}')
    grid = (B // tq,)

    q_map = lambda i: (i, 0)     # per-tile query blocks
    k_map = lambda i: (0, 0)     # key-side operands stay resident

    # Explicit scoped-VMEM limit sized from the actual temporaries (clamped to
    # stay under v7x's 64 MiB physical VMEM).
    n_slabs = 8 if family_info else 4
    est = 4 * (2 * B * D + 2 * tq * D + n_slabs * tq * B + 16 * (B + tq))
    vmem_limit = int(min(max(est + (2 << 20), 32 * 1024 * 1024),
                         56 * 1024 * 1024))

    kernel = functools.partial(_hidistance_kernel, float(margin),
                               bool(family_info), B)
    per_row = pl.pallas_call(
        kernel,
        out_shape=jax.ShapeDtypeStruct((B, 1), jnp.float32),
        grid=grid,
        in_specs=[
            pl.BlockSpec((tq, D), q_map),   # query feature tile
            pl.BlockSpec((B, D), k_map),    # full key features (resident)
            pl.BlockSpec((tq, 1), q_map),   # ||xq||^2 column tile
            pl.BlockSpec((1, B), k_map),    # ||xk||^2 row (resident)
            pl.BlockSpec((tq, 1), q_map),   # binary labels (column tile)
            pl.BlockSpec((1, B), k_map),    # binary labels (row, resident)
            pl.BlockSpec((tq, 1), q_map),   # family labels (column tile)
            pl.BlockSpec((1, B), k_map),    # family labels (row, resident)
        ],
        out_specs=pl.BlockSpec((tq, 1), q_map),
        compiler_params=pltpu.CompilerParams(
            dimension_semantics=("parallel",),
            vmem_limit_bytes=vmem_limit),
    )(x, x, sq, sq.reshape(1, B), bin_col, bin_col.reshape(1, B),
      lab_col, lab_col.reshape(1, B))
    return jnp.mean(per_row)


# ---------------- pure-JAX reference (mirrors the torch code) ----------------
def _reference(features, binary_cat_labels, labels, margin, family_info):
    B = features.shape[0]
    bin_lab = binary_cat_labels[:, 1].reshape(-1, 1).astype(jnp.float32)
    lab = labels.reshape(-1, 1).astype(jnp.float32)
    binary_mask = (bin_lab == bin_lab.T).astype(jnp.float32)
    multi_mask = (lab == lab.T).astype(jnp.float32)
    other_mal_mask = binary_mask - multi_mask
    ben = 1.0 - bin_lab
    same_ben_mask = ben @ ben.T
    same_mal_fam_mask = multi_mask - same_ben_mask
    binary_negate_mask = 1.0 - binary_mask
    diag_mask = 1.0 - jnp.eye(B, dtype=jnp.float32)
    binary_mask = binary_mask * diag_mask
    other_mal_mask = other_mal_mask * diag_mask
    same_ben_mask = same_ben_mask * diag_mask
    same_mal_fam_mask = same_mal_fam_mask * diag_mask

    x = features.astype(jnp.float32)
    xn = jnp.linalg.norm(x, axis=1, keepdims=True)
    dist = xn * xn + (xn * xn).T - 2.0 * (x @ x.T)
    dist = jnp.maximum(dist, 1e-10)

    if not family_info:
        sep = jnp.maximum(binary_negate_mask.sum(1) * margin
                          - jnp.sum(binary_negate_mask * dist, axis=1), 0.0)
        clu = jnp.maximum(jnp.sum(binary_mask * dist, axis=1)
                          - binary_mask.sum(1) * margin, 0.0)
        return jnp.mean(sep + clu)
    else:
        s_sb = jnp.maximum(jnp.sum(same_ben_mask * dist, 1)
                           - same_ben_mask.sum(1) * margin, 0.0)
        s_om = jnp.maximum(jnp.sum(other_mal_mask * dist, 1)
                           - other_mal_mask.sum(1) * margin, 0.0)
        s_sf = jnp.sum(same_mal_fam_mask * dist, 1)
        s_bn = jnp.maximum(binary_negate_mask.sum(1) * 2.0 * margin
                           - jnp.sum(binary_negate_mask * dist, 1), 0.0)
        loss = (s_sb / jnp.maximum(same_ben_mask.sum(1), 1.0)
                + s_om / jnp.maximum(other_mal_mask.sum(1), 1.0)
                + s_sf / jnp.maximum(same_mal_fam_mask.sum(1), 1.0)
                + s_bn / jnp.maximum(binary_negate_mask.sum(1), 1.0))
        return jnp.mean(loss)


if __name__ == "__main__":
    key = jax.random.PRNGKey(0)
    kf, kl = jax.random.split(key)
    B, D = 64, 32
    features = jax.random.normal(kf, (B, D), dtype=jnp.float32)
    labels = jax.random.randint(kl, (B,), 0, 5)     # 0 = benign, >0 = malware family
    binary = (labels > 0).astype(jnp.int32)
    binary_cat_labels = jax.nn.one_hot(binary, 2, dtype=jnp.float32)

    ref = _reference(features, binary_cat_labels, labels, 10.0, False)
    ref_fam = _reference(features, binary_cat_labels, labels, 10.0, True)

    # Single-tile (auto) runs.
    loss = hi_distance_loss(features, binary_cat_labels, labels,
                            margin=10.0, family_info=False)
    loss_fam = hi_distance_loss(features, binary_cat_labels, labels,
                                margin=10.0, family_info=True)
    # Multi-tile runs to exercise the row-tiled grid path.
    loss_t = hi_distance_loss(features, binary_cat_labels, labels,
                              margin=10.0, family_info=False, tile=16)
    loss_fam_t = hi_distance_loss(features, binary_cat_labels, labels,
                                  margin=10.0, family_info=True, tile=16)
    jax.block_until_ready((loss, loss_fam, loss_t, loss_fam_t))

    assert jnp.allclose(loss, ref, rtol=1e-3, atol=1e-2), (loss, ref)
    assert jnp.allclose(loss_fam, ref_fam, rtol=1e-3, atol=1e-2), (loss_fam, ref_fam)
    assert jnp.allclose(loss_t, ref, rtol=1e-3, atol=1e-2), (loss_t, ref)
    assert jnp.allclose(loss_fam_t, ref_fam, rtol=1e-3, atol=1e-2), (loss_fam_t, ref_fam)
    print("KERNEL_OK")
</pallas_src>

<mosaic_0001>
module attributes {stable_mosaic.version = 11 : i64} {
  func.func @_hidistance_kernel(%arg0: i32, %arg1: memref<64x32xf32, #tpu.memory_space<vmem>>, %arg2: memref<64x32xf32, #tpu.memory_space<vmem>>, %arg3: memref<64x1xf32, #tpu.memory_space<vmem>>, %arg4: memref<1x64xf32, #tpu.memory_space<vmem>>, %arg5: memref<64x1xf32, #tpu.memory_space<vmem>>, %arg6: memref<1x64xf32, #tpu.memory_space<vmem>>, %arg7: memref<64x1xf32, #tpu.memory_space<vmem>>, %arg8: memref<1x64xf32, #tpu.memory_space<vmem>>, %arg9: memref<64x1xf32, #tpu.memory_space<vmem>>) attributes {dimension_semantics = [#tpu.dimension_semantics<parallel>], iteration_bounds = array<i64: 1>, scalar_prefetch = 0 : i64, scratch_operands = 0 : i64, tpu.core_type = #tpu.core_type<tc>, window_params = [{transform_indices = @transform_0, window_bounds = array<i64: 64, 32>}, {pipeline_mode = #tpu.pipeline_mode<synchronous>, transform_indices = @transform_1, window_bounds = array<i64: 64, 32>}, {transform_indices = @transform_2, window_bounds = array<i64: 64, 1>}, {pipeline_mode = #tpu.pipeline_mode<synchronous>, transform_indices = @transform_3, window_bounds = array<i64: 1, 64>}, {transform_indices = @transform_4, window_bounds = array<i64: 64, 1>}, {pipeline_mode = #tpu.pipeline_mode<synchronous>, transform_indices = @transform_5, window_bounds = array<i64: 1, 64>}, {transform_indices = @transform_6, window_bounds = array<i64: 64, 1>}, {pipeline_mode = #tpu.pipeline_mode<synchronous>, transform_indices = @transform_7, window_bounds = array<i64: 1, 64>}, {transform_indices = @transform_8, window_bounds = array<i64: 64, 1>}]} {
    %c0 = arith.constant 0 : index
    %c0_0 = arith.constant 0 : index
    %0 = vector.load %arg1[%c0, %c0_0] : memref<64x32xf32, #tpu.memory_space<vmem>>, vector<64x32xf32>
    %c0_1 = arith.constant 0 : index
    %c0_2 = arith.constant 0 : index
    %1 = vector.load %arg2[%c0_1, %c0_2] : memref<64x32xf32, #tpu.memory_space<vmem>>, vector<64x32xf32>
    %cst = arith.constant dense<0.000000e+00> : vector<64x64xf32>
    %2 = tpu.matmul %0, %1, %cst {dimension_numbers = #tpu.dot_dimension_numbers<[1], [1], [0], [0], [0, 0, 1, 0], [], []>} : vector<64x32xf32>, vector<64x32xf32>, vector<64x64xf32> -> vector<64x64xf32>
    %c0_3 = arith.constant 0 : index
    %c0_4 = arith.constant 0 : index
    %3 = vector.load %arg3[%c0_3, %c0_4] : memref<64x1xf32, #tpu.memory_space<vmem>>, vector<64x1xf32>
    %c0_5 = arith.constant 0 : index
    %c0_6 = arith.constant 0 : index
    %4 = vector.load %arg4[%c0_5, %c0_6] : memref<1x64xf32, #tpu.memory_space<vmem>>, vector<1x64xf32>
    %5 = vector.broadcast %3 : vector<64x1xf32> to vector<64x64xf32>
    %6 = vector.broadcast %4 : vector<1x64xf32> to vector<64x64xf32>
    %7 = arith.addf %5, %6 : vector<64x64xf32>
    %cst_7 = arith.constant 2.000000e+00 : f32
    %8 = vector.broadcast %cst_7 : f32 to vector<64x64xf32>
    %9 = arith.mulf %8, %2 : vector<64x64xf32>
    %10 = arith.subf %7, %9 : vector<64x64xf32>
    %cst_8 = arith.constant 1.000000e-10 : f32
    %11 = vector.broadcast %cst_8 : f32 to vector<64x64xf32>
    %12 = arith.maximumf %10, %11 : vector<64x64xf32>
    %c0_9 = arith.constant 0 : index
    %c0_10 = arith.constant 0 : index
    %13 = vector.load %arg5[%c0_9, %c0_10] : memref<64x1xf32, #tpu.memory_space<vmem>>, vector<64x1xf32>
    %c0_11 = arith.constant 0 : index
    %c0_12 = arith.constant 0 : index
    %14 = vector.load %arg6[%c0_11, %c0_12] : memref<1x64xf32, #tpu.memory_space<vmem>>, vector<1x64xf32>
    %15 = vector.broadcast %13 : vector<64x1xf32> to vector<64x64xf32>
    %16 = vector.broadcast %14 : vector<1x64xf32> to vector<64x64xf32>
    %17 = arith.cmpf oeq, %15, %16 : vector<64x64xf32>
    %18 = arith.extui %17 : vector<64x64xi1> to vector<64x64xi32>
    %19 = arith.sitofp %18 : vector<64x64xi32> to vector<64x64xf32>
    %cst_13 = arith.constant dense<0.000000e+00> : vector<64xf32>
    %20 = vector.multi_reduction <add>, %12, %cst_13 [1] : vector<64x64xf32> to vector<64xf32>
    %21 = vector.shape_cast %20 : vector<64xf32> to vector<64x1xf32>
    %22 = arith.mulf %19, %12 : vector<64x64xf32>
    %cst_14 = arith.constant dense<0.000000e+00> : vector<64xf32>
    %23 = vector.multi_reduction <add>, %22, %cst_14 [1] : vector<64x64xf32> to vector<64xf32>
    %24 = vector.shape_cast %23 : vector<64xf32> to vector<64x1xf32>
    %cst_15 = arith.constant dense<0.000000e+00> : vector<64xf32>
    %25 = vector.multi_reduction <add>, %19, %cst_15 [1] : vector<64x64xf32> to vector<64xf32>
    %26 = vector.shape_cast %25 : vector<64xf32> to vector<64x1xf32>
    %cst_16 = arith.constant 6.400000e+01 : f32
    %27 = vector.broadcast %cst_16 : f32 to vector<64x1xf32>
    %28 = arith.subf %27, %26 : vector<64x1xf32>
    %29 = arith.subf %21, %24 : vector<64x1xf32>
    %cst_17 = arith.constant 1.000000e+00 : f32
    %30 = vector.broadcast %cst_17 : f32 to vector<64x1xf32>
    %31 = arith.subf %26, %30 : vector<64x1xf32>
    %cst_18 = arith.constant 1.000000e+01 : f32
    %32 = vector.broadcast %cst_18 : f32 to vector<64x1xf32>
    %33 = arith.mulf %28, %32 : vector<64x1xf32>
    %34 = arith.subf %33, %29 : vector<64x1xf32>
    %cst_19 = arith.constant 0.000000e+00 : f32
    %35 = vector.broadcast %cst_19 : f32 to vector<64x1xf32>
    %36 = arith.maximumf %34, %35 : vector<64x1xf32>
    %cst_20 = arith.constant 1.000000e+01 : f32
    %37 = vector.broadcast %cst_20 : f32 to vector<64x1xf32>
    %38 = arith.mulf %31, %37 : vector<64x1xf32>
    %39 = arith.subf %24, %38 : vector<64x1xf32>
    %cst_21 = arith.constant 0.000000e+00 : f32
    %40 = vector.broadcast %cst_21 : f32 to vector<64x1xf32>
    %41 = arith.maximumf %39, %40 : vector<64x1xf32>
    %42 = arith.addf %36, %41 : vector<64x1xf32>
    %c0_22 = arith.constant 0 : index
    %c0_23 = arith.constant 0 : index
    %43 = vector.load %arg9[%c0_22, %c0_23] : memref<64x1xf32, #tpu.memory_space<vmem>>, vector<64x1xf32>
    tpu.vector_store %arg9[%c0_22, %c0_23], %42 {strides = array<i32>} : memref<64x1xf32, #tpu.memory_space<vmem>>, vector<64x1xf32>,
    return
  }
  func.func @transform_0(%arg0: i32) -> (i32, i32) {
    %c0_i32 = arith.constant 0 : i32
    %c0_i32_0 = arith.constant 0 : i32
    return %arg0, %c0_i32 : i32, i32
  }
  func.func @transform_1(%arg0: i32) -> (i32, i32) {
    %c0_i32 = arith.constant 0 : i32
    %c0_i32_0 = arith.constant 0 : i32
    %c0_i32_1 = arith.constant 0 : i32
    return %c0_i32, %c0_i32_0 : i32, i32
  }
  func.func @transform_2(%arg0: i32) -> (i32, i32) {
    %c0_i32 = arith.constant 0 : i32
    %c0_i32_0 = arith.constant 0 : i32
    return %arg0, %c0_i32 : i32, i32
  }
  func.func @transform_3(%arg0: i32) -> (i32, i32) {
    %c0_i32 = arith.constant 0 : i32
    %c0_i32_0 = arith.constant 0 : i32
    %c0_i32_1 = arith.constant 0 : i32
    return %c0_i32, %c0_i32_0 : i32, i32
  }
  func.func @transform_4(%arg0: i32) -> (i32, i32) {
    %c0_i32 = arith.constant 0 : i32
    %c0_i32_0 = arith.constant 0 : i32
    return %arg0, %c0_i32 : i32, i32
  }
  func.func @transform_5(%arg0: i32) -> (i32, i32) {
    %c0_i32 = arith.constant 0 : i32
    %c0_i32_0 = arith.constant 0 : i32
    %c0_i32_1 = arith.constant 0 : i32
    return %c0_i32, %c0_i32_0 : i32, i32
  }
  func.func @transform_6(%arg0: i32) -> (i32, i32) {
    %c0_i32 = arith.constant 0 : i32
    %c0_i32_0 = arith.constant 0 : i32
    return %arg0, %c0_i32 : i32, i32
  }
  func.func @transform_7(%arg0: i32) -> (i32, i32) {
    %c0_i32 = arith.constant 0 : i32
    %c0_i32_0 = arith.constant 0 : i32
    %c0_i32_1 = arith.constant 0 : i32
    return %c0_i32, %c0_i32_0 : i32, i32
  }
  func.func @transform_8(%arg0: i32) -> (i32, i32) {
    %c0_i32 = arith.constant 0 : i32
    %c0_i32_0 = arith.constant 0 : i32
    return %arg0, %c0_i32 : i32, i32
  }
}

</mosaic_0001>

<llo_original>
// kernel: tpu_custom_call.1
$region0: #{tpu_custom_call.1}
  #allocation0 [shape = 'u32[]', space=smem, size = 0x4, offset = 0x4, fixed_abs, tag = 'smem constant byte address 0x4 - core index']
  #allocation1 [shape = 'u32[144,128]{1,0:T(1,128)}', space=vmem, size = 0x12000, scoped, tag = 'internal scratch']
  %s0 = inlined_call_operand.vmem [shape: f32[64,32], index: 0, kind: input, shape index: {}]
  %s1 = inlined_call_operand.vmem [shape: f32[64,32], index: 1, kind: input, shape index: {}]
  %s2 = inlined_call_operand.vmem [shape: f32[64,1], index: 2, kind: input, shape index: {}]
  %s3 = inlined_call_operand.vmem [shape: f32[1,64], index: 3, kind: input, shape index: {}]
  %s4 = inlined_call_operand.vmem [shape: f32[64,1], index: 4, kind: input, shape index: {}]
  %s5 = inlined_call_operand.vmem [shape: f32[1,64], index: 5, kind: input, shape index: {}]
  %s6 = inlined_call_operand.vmem [shape: f32[64,1], index: 6, kind: input, shape index: {}]
  %s7 = inlined_call_operand.vmem [shape: f32[1,64], index: 7, kind: input, shape index: {}]
  %s8 = inlined_call_operand.vmem [shape: f32[64,1], index: 8, kind: output, shape index: {}]
  %s9 = sld [smem:[#allocation0]]
  $region42: #{tpu_custom_call.1} parent=0
    _
  %s11 = ssub.s32 1, %s9
  %s12 = scalar_select 0, %s11, %s9
  // Predicated region
  $region2: #{tpu_custom_call.1} parent=0 // pred_check
    _
  $region3: #{tpu_custom_call.1} parent=0 // pred_check_branch
    %14 = sbr.rel (0) target = $region5
  $region4: #{tpu_custom_call.1} parent=0 // pred_region
    _
  $region5: #{tpu_custom_call.1} parent=0 // pred_fallthru
    _
  // Predicated region
  $region6: #{tpu_custom_call.1} parent=0 // pred_check
    _
  $region7: #{tpu_custom_call.1} parent=0 // pred_check_branch
    %16 = sbr.rel (0) target = $region9
  $region8: #{tpu_custom_call.1} parent=0 // pred_region
    _
  $region9: #{tpu_custom_call.1} parent=0 // pred_fallthru
    _
  // Predicated region
  $region10: #{tpu_custom_call.1} parent=0 // pred_check
    _
  $region11: #{tpu_custom_call.1} parent=0 // pred_check_branch
    %18 = sbr.rel (0) target = $region13
  $region12: #{tpu_custom_call.1} parent=0 // pred_region
    _
  $region13: #{tpu_custom_call.1} parent=0 // pred_fallthru
    _
  // Predicated region
  $region14: #{tpu_custom_call.1} parent=0 // pred_check
    _
  $region15: #{tpu_custom_call.1} parent=0 // pred_check_branch
    %20 = sbr.rel (0) target = $region17
  $region16: #{tpu_custom_call.1} parent=0 // pred_region
    _
  $region17: #{tpu_custom_call.1} parent=0 // pred_fallthru
    _
  // Predicated region
  $region18: #{tpu_custom_call.1} parent=0 // pred_check
    _
  $region19: #{tpu_custom_call.1} parent=0 // pred_check_branch
    %22 = sbr.rel (0) target = $region21
  $region20: #{tpu_custom_call.1} parent=0 // pred_region
    _
  $region21: #{tpu_custom_call.1} parent=0 // pred_fallthru
    _
  // Predicated region
  $region22: #{tpu_custom_call.1} parent=0 // pred_check
    _
  $region23: #{tpu_custom_call.1} parent=0 // pred_check_branch
    %24 = sbr.rel (0) target = $region25
  $region24: #{tpu_custom_call.1} parent=0 // pred_region
    _
  $region25: #{tpu_custom_call.1} parent=0 // pred_fallthru
    _
  // Predicated region
  $region26: #{tpu_custom_call.1} parent=0 // pred_check
    _
  $region27: #{tpu_custom_call.1} parent=0 // pred_check_branch
    %26 = sbr.rel (0) target = $region29
  $region28: #{tpu_custom_call.1} parent=0 // pred_region
    _
  $region29: #{tpu_custom_call.1} parent=0 // pred_fallthru
    _
  // Predicated region
  $region30: #{tpu_custom_call.1} parent=0 // pred_check
    _
  $region31: #{tpu_custom_call.1} parent=0 // pred_check_branch
    %28 = sbr.rel (0) target = $region33
  $region32: #{tpu_custom_call.1} parent=0 // pred_region
    _
  $region33: #{tpu_custom_call.1} parent=0 // pred_fallthru
    _
  %v29 = vld [vmem:[%s0] sm:$0xff]
  %v30 = vld [vmem:[%s0 + $0x8] sm:$0xff]
  %v31 = vld [vmem:[%s0 + $0x10] sm:$0xff]
  %v32 = vld [vmem:[%s0 + $0x18] sm:$0xff]
  %v33 = vld [vmem:[%s0 + $0x20] sm:$0xff]
  %v34 = vld [vmem:[%s0 + $0x28] sm:$0xff]
  %v35 = vld [vmem:[%s0 + $0x30] sm:$0xff]
  %v36 = vld [vmem:[%s0 + $0x38] sm:$0xff]
  %v37 = vld [vmem:[%s1] sm:$0xff]
  %v38 = vld [vmem:[%s1 + $0x8] sm:$0xff]
  %v39 = vld [vmem:[%s1 + $0x10] sm:$0xff]
  %v40 = vld [vmem:[%s1 + $0x18] sm:$0xff]
  %v41 = vld [vmem:[%s1 + $0x20] sm:$0xff]
  %v42 = vld [vmem:[%s1 + $0x28] sm:$0xff]
  %v43 = vld [vmem:[%s1 + $0x30] sm:$0xff]
  %v44 = vld [vmem:[%s1 + $0x38] sm:$0xff]
  %vm45 = vcmask 261120
  %v47 = vsel %vm45, %v29, 0
  %v50 = vsel %vm45, %v30, 0
  %v53 = vsel %vm45, %v31, 0
  %v56 = vsel %vm45, %v32, 0
  %v59 = vsel %vm45, %v33, 0
  %v62 = vsel %vm45, %v34, 0
  %v65 = vsel %vm45, %v35, 0
  %v68 = vsel %vm45, %v36, 0
  %v71 = vsel %vm45, %v37, 0
  %v74 = vsel %vm45, %v38, 0
  %v77 = vsel %vm45, %v39, 0
  %v80 = vsel %vm45, %v40, 0
  %v83 = vsel %vm45, %v41, 0
  %v86 = vsel %vm45, %v42, 0
  %v89 = vsel %vm45, %v43, 0
  %v92 = vsel %vm45, %v44, 0
  %94 = vmatprep.subr.mxu0 0.0
  %95 = vmatpush1.xpose.msra.mxu0 0.0
  %96 = vmatprep.subr.mxu0 0.0
  %97 = vmatpush1.xpose.msra.mxu0 0.0
  %98 = vmatprep.subr.mxu0 0.0
  %99 = vmatpush1.xpose.msra.mxu0 0.0
  %100 = vmatprep.subr.mxu0 0.0
  %101 = vmatpush1.xpose.msra.mxu0 0.0
  %102 = vmatprep.subr.mxu0 0.0
  %103 = vmatpush1.xpose.msra.mxu0 0.0
  %104 = vmatprep.subr.mxu0 0.0
  %105 = vmatpush1.xpose.msra.mxu0 0.0
  %106 = vmatprep.subr.mxu0 0.0
  %107 = vmatpush1.xpose.msra.mxu0 0.0
  %108 = vmatprep.subr.mxu0 0.0
  %109 = vmatpush1.xpose.msra.mxu0 0.0
  %110 = vmatprep.subr.mxu0 0.0
  %111 = vmatpush1.xpose.msra.mxu0 %v92
  %112 = vmatprep.subr.mxu0 0.0
  %113 = vmatpush1.xpose.msra.mxu0 %v89
  %114 = vmatprep.subr.mxu0 0.0
  %115 = vmatpush1.xpose.msra.mxu0 %v86
  %116 = vmatprep.subr.mxu0 0.0
  %117 = vmatpush1.xpose.msra.mxu0 %v83
  %118 = vmatprep.subr.mxu0 0.0
  %119 = vmatpush1.xpose.msra.mxu0 %v80
  %120 = vmatprep.subr.mxu0 0.0
  %121 = vmatpush1.xpose.msra.mxu0 %v77
  %122 = vmatprep.subr.mxu0 0.0
  %123 = vmatpush1.xpose.msra.mxu0 %v74
  %124 = vmatprep.subr.mxu0 0.0
  %125 = vmatpush1.xpose.msra.mxu0 %v71
  %126 = vmatprep.subr.mxu0 0.0
  %127 = vmatpush2.xpose.msra.mxu0 0.0
  %128 = vmatprep.subr.mxu0 0.0
  %129 = vmatpush2.xpose.msra.mxu0 0.0
  %130 = vmatprep.subr.mxu0 0.0
  %131 = vmatpush2.xpose.msra.mxu0 0.0
  %132 = vmatprep.subr.mxu0 0.0
  %133 = vmatpush2.xpose.msra.mxu0 0.0
  %134 = vmatprep.subr.mxu0 0.0
  %135 = vmatpush2.xpose.msra.mxu0 0.0
  %136 = vmatprep.subr.mxu0 0.0
  %137 = vmatpush2.xpose.msra.mxu0 0.0
  %138 = vmatprep.subr.mxu0 0.0
  %139 = vmatpush2.xpose.msra.mxu0 0.0
  %140 = vmatprep.subr.mxu0 0.0
  %141 = vmatpush2.xpose.msra.mxu0 0.0
  %142 = vmatprep.subr.mxu0 0.0
  %143 = vmatpush2.xpose.msra.mxu0 0.0
  %144 = vmatprep.subr.mxu0 0.0
  %145 = vmatpush2.xpose.msra.mxu0 0.0
  %146 = vmatprep.subr.mxu0 0.0
  %147 = vmatpush2.xpose.msra.mxu0 0.0
  %148 = vmatprep.subr.mxu0 0.0
  %149 = vmatpush2.xpose.msra.mxu0 0.0
  %150 = vmatprep.subr.mxu0 0.0
  %151 = vmatpush2.xpose.msra.mxu0 0.0
  %152 = vmatprep.subr.mxu0 0.0
  %153 = vmatpush2.xpose.msra.mxu0 0.0
  %154 = vmatprep.subr.mxu0 0.0
  %155 = vmatpush2.xpose.msra.mxu0 0.0
  %156 = vmatprep.subr.mxu0 0.0
  %157 = vmatpush2.xpose.msra.mxu0 0.0
  %158 = vmatprep.mubr.f32.mxu0 0.0
  %159 = vmatmul.mubr.f32.gmra.mxu0 %v47
  %v160 = vpop.f32.mrf.mxu0
  %v161 = vadd.f32 0.0, %v160
  %v162 = vpop.f32.mrf.mxu0
  %163 = vmatprep.mubr.f32.mxu0 0.0
  %164 = vmatmul.mubr.f32.gmra.mxu0 %v50
  %v165 = vpop.f32.mrf.mxu0
  %v166 = vadd.f32 0.0, %v165
  %v167 = vpop.f32.mrf.mxu0
  %168 = vmatprep.mubr.f32.mxu0 0.0
  %169 = vmatmul.mubr.f32.gmra.mxu0 %v53
  %v170 = vpop.f32.mrf.mxu0
  %v171 = vadd.f32 0.0, %v170
  %v172 = vpop.f32.mrf.mxu0
  %173 = vmatprep.mubr.f32.mxu0 0.0
  %174 = vmatmul.mubr.f32.gmra.mxu0 %v56
  %v175 = vpop.f32.mrf.mxu0
  %v176 = vadd.f32 0.0, %v175
  %v177 = vpop.f32.mrf.mxu0
  %178 = vmatprep.mubr.f32.mxu0 0.0
  %179 = vmatmul.mubr.f32.gmra.mxu0 %v59
  %v180 = vpop.f32.mrf.mxu0
  %v181 = vadd.f32 0.0, %v180
  %v182 = vpop.f32.mrf.mxu0
  %183 = vmatprep.mubr.f32.mxu0 0.0
  %184 = vmatmul.mubr.f32.gmra.mxu0 %v62
  %v185 = vpop.f32.mrf.mxu0
  %v186 = vadd.f32 0.0, %v185
  %v187 = vpop.f32.mrf.mxu0
  %188 = vmatprep.mubr.f32.mxu0 0.0
  %189 = vmatmul.mubr.f32.gmra.mxu0 %v65
  %v190 = vpop.f32.mrf.mxu0
  %v191 = vadd.f32 0.0, %v190
  %v192 = vpop.f32.mrf.mxu0
  %193 = vmatprep.mubr.f32.mxu0 0.0
  %194 = vmatmul.mubr.f32.gmra.mxu0 %v68
  %v195 = vpop.f32.mrf.mxu0
  %v196 = vadd.f32 0.0, %v195
  %v197 = vpop.f32.mrf.mxu0
  %198 = vdwg.mxu0
  %v199 = vld [vmem:[%s2] sm:$0xff]
  %v200 = vld [vmem:[%s2 + $0x8] sm:$0xff]
  %v201 = vld [vmem:[%s2 + $0x10] sm:$0xff]
  %v202 = vld [vmem:[%s2 + $0x18] sm:$0xff]
  %v203 = vld [vmem:[%s2 + $0x20] sm:$0xff]
  %v204 = vld [vmem:[%s2 + $0x28] sm:$0xff]
  %v205 = vld [vmem:[%s2 + $0x30] sm:$0xff]
  %v206 = vld [vmem:[%s2 + $0x38] sm:$0xff]
  %v207 = vld [vmem:[%s3] sm:$0x1]
  %209 = vset.pattern.permute.xlu0 0
  %210 = vperm.xlu0 %209, %v199
  %v211 = vpop.permute.xlu0 %210
  %214 = vset.pattern.permute.xlu0 0
  %215 = vperm.xlu0 %214, %v200
  %v216 = vpop.permute.xlu0 %215
  %219 = vset.pattern.permute.xlu0 0
  %220 = vperm.xlu0 %219, %v201
  %v221 = vpop.permute.xlu0 %220
  %224 = vset.pattern.permute.xlu0 0
  %225 = vperm.xlu0 %224, %v202
  %v226 = vpop.permute.xlu0 %225
  %229 = vset.pattern.permute.xlu0 0
  %230 = vperm.xlu0 %229, %v203
  %v231 = vpop.permute.xlu0 %230
  %234 = vset.pattern.permute.xlu0 0
  %235 = vperm.xlu0 %234, %v204
  %v236 = vpop.permute.xlu0 %235
  %239 = vset.pattern.permute.xlu0 0
  %240 = vperm.xlu0 %239, %v205
  %v241 = vpop.permute.xlu0 %240
  %244 = vset.pattern.permute.xlu0 0
  %245 = vperm.xlu0 %244, %v206
  %v246 = vpop.permute.xlu0 %245
  %v249 = vlaneseq
  %v250 = vshrl.u32 %v249, 7
  %v251 = vsub.s32 0, %v250
  %v252 = vrot.slane %v207, %v251
  %v254 = vadd.f32 %v211, %v252
  %v255 = vadd.f32 %v216, %v252
  %v256 = vadd.f32 %v221, %v252
  %v257 = vadd.f32 %v226, %v252
  %v258 = vadd.f32 %v231, %v252
  %v259 = vadd.f32 %v236, %v252
  %v260 = vadd.f32 %v241, %v252
  %v261 = vadd.f32 %v246, %v252
  %v262 = vmul.f32 %v161, 2.0
  %v263 = vmul.f32 %v166, 2.0
  %v264 = vmul.f32 %v171, 2.0
  %v265 = vmul.f32 %v176, 2.0
  %v266 = vmul.f32 %v181, 2.0
  %v267 = vmul.f32 %v186, 2.0
  %v268 = vmul.f32 %v191, 2.0
  %v269 = vmul.f32 %v196, 2.0
  %v270 = vsub.f32 %v254, %v262
  %v271 = vsub.f32 %v255, %v263
  %v272 = vsub.f32 %v256, %v264
  %v273 = vsub.f32 %v257, %v265
  %v274 = vsub.f32 %v258, %v266
  %v275 = vsub.f32 %v259, %v267
  %v276 = vsub.f32 %v260, %v268
  %v277 = vsub.f32 %v261, %v269
  %v278 = vmax.f32 %v270, 1e-10
  %v279 = vmax.f32 %v271, 1e-10
  %v280 = vmax.f32 %v272, 1e-10
  %v281 = vmax.f32 %v273, 1e-10
  %v282 = vmax.f32 %v274, 1e-10
  %v283 = vmax.f32 %v275, 1e-10
  %v284 = vmax.f32 %v276, 1e-10
  %v285 = vmax.f32 %v277, 1e-10
  %v286 = vld [vmem:[%s4] sm:$0xff]
  %v287 = vld [vmem:[%s4 + $0x8] sm:$0xff]
  %v288 = vld [vmem:[%s4 + $0x10] sm:$0xff]
  %v289 = vld [vmem:[%s4 + $0x18] sm:$0xff]
  %v290 = vld [vmem:[%s4 + $0x20] sm:$0xff]
  %v291 = vld [vmem:[%s4 + $0x28] sm:$0xff]
  %v292 = vld [vmem:[%s4 + $0x30] sm:$0xff]
  %v293 = vld [vmem:[%s4 + $0x38] sm:$0xff]
  %v294 = vld [vmem:[%s5] sm:$0x1]
  %296 = vset.pattern.permute.xlu0 0
  %297 = vperm.xlu0 %296, %v286
  %v298 = vpop.permute.xlu0 %297
  %301 = vset.pattern.permute.xlu0 0
  %302 = vperm.xlu0 %301, %v287
  %v303 = vpop.permute.xlu0 %302
  %306 = vset.pattern.permute.xlu0 0
  %307 = vperm.xlu0 %306, %v288
  %v308 = vpop.permute.xlu0 %307
  %311 = vset.pattern.permute.xlu0 0
  %312 = vperm.xlu0 %311, %v289
  %v313 = vpop.permute.xlu0 %312
  %316 = vset.pattern.permute.xlu0 0
  %317 = vperm.xlu0 %316, %v290
  %v318 = vpop.permute.xlu0 %317
  %321 = vset.pattern.permute.xlu0 0
  %322 = vperm.xlu0 %321, %v291
  %v323 = vpop.permute.xlu0 %322
  %326 = vset.pattern.permute.xlu0 0
  %327 = vperm.xlu0 %326, %v292
  %v328 = vpop.permute.xlu0 %327
  %331 = vset.pattern.permute.xlu0 0
  %332 = vperm.xlu0 %331, %v293
  %v333 = vpop.permute.xlu0 %332
  %v336 = vlaneseq
  %v337 = vshrl.u32 %v336, 7
  %v338 = vsub.s32 0, %v337
  %v339 = vrot.slane %v294, %v338
  %vm341 = vcmp.eq.f32.partialorder %v298, %v339
  %vm342 = vcmp.eq.f32.partialorder %v303, %v339
  %vm343 = vcmp.eq.f32.partialorder %v308, %v339
  %vm344 = vcmp.eq.f32.partialorder %v313, %v339
  %vm345 = vcmp.eq.f32.partialorder %v318, %v339
  %vm346 = vcmp.eq.f32.partialorder %v323, %v339
  %vm347 = vcmp.eq.f32.partialorder %v328, %v339
  %vm348 = vcmp.eq.f32.partialorder %v333, %v339
  %v349 = vsel %vm341, 1, 0
  %v350 = vsel %vm342, 1, 0
  %v351 = vsel %vm343, 1, 0
  %v352 = vsel %vm344, 1, 0
  %v353 = vsel %vm345, 1, 0
  %v354 = vsel %vm346, 1, 0
  %v355 = vsel %vm347, 1, 0
  %v356 = vsel %vm348, 1, 0
  %v357 = vcvt.s32.f32 %v349
  %v358 = vcvt.s32.f32 %v350
  %v359 = vcvt.s32.f32 %v351
  %v360 = vcvt.s32.f32 %v352
  %v361 = vcvt.s32.f32 %v353
  %v362 = vcvt.s32.f32 %v354
  %v363 = vcvt.s32.f32 %v355
  %v364 = vcvt.s32.f32 %v356
  %vm365 = vcmask 523264
  %v366 = vsel %vm365, %v278, 0.0
  %367 = vadd.xlane.f32.xlu0 %v366
  %v368 = vpop.xlane.xlu0 %367
  %v369 = vsel %vm365, %v279, 0.0
  %370 = vadd.xlane.f32.xlu0 %v369
  %v371 = vpop.xlane.xlu0 %370
  %v372 = vsel %vm365, %v280, 0.0
  %373 = vadd.xlane.f32.xlu0 %v372
  %v374 = vpop.xlane.xlu0 %373
  %v375 = vsel %vm365, %v281, 0.0
  %376 = vadd.xlane.f32.xlu0 %v375
  %v377 = vpop.xlane.xlu0 %376
  %v378 = vsel %vm365, %v282, 0.0
  %379 = vadd.xlane.f32.xlu0 %v378
  %v380 = vpop.xlane.xlu0 %379
  %v381 = vsel %vm365, %v283, 0.0
  %382 = vadd.xlane.f32.xlu0 %v381
  %v383 = vpop.xlane.xlu0 %382
  %v384 = vsel %vm365, %v284, 0.0
  %385 = vadd.xlane.f32.xlu0 %v384
  %v386 = vpop.xlane.xlu0 %385
  %v387 = vsel %vm365, %v285, 0.0
  %388 = vadd.xlane.f32.xlu0 %v387
  %v389 = vpop.xlane.xlu0 %388
  %v390 = vmul.f32 %v357, %v278
  %v391 = vmul.f32 %v358, %v279
  %v392 = vmul.f32 %v359, %v280
  %v393 = vmul.f32 %v360, %v281
  %v394 = vmul.f32 %v361, %v282
  %v395 = vmul.f32 %v362, %v283
  %v396 = vmul.f32 %v363, %v284
  %v397 = vmul.f32 %v364, %v285
  %v398 = vsel %vm365, %v390, 0.0
  %399 = vadd.xlane.f32.xlu0 %v398
  %v400 = vpop.xlane.xlu0 %399
  %v401 = vsel %vm365, %v391, 0.0
  %402 = vadd.xlane.f32.xlu0 %v401
  %v403 = vpop.xlane.xlu0 %402
  %v404 = vsel %vm365, %v392, 0.0
  %405 = vadd.xlane.f32.xlu0 %v404
  %v406 = vpop.xlane.xlu0 %405
  %v407 = vsel %vm365, %v393, 0.0
  %408 = vadd.xlane.f32.xlu0 %v407
  %v409 = vpop.xlane.xlu0 %408
  %v410 = vsel %vm365, %v394, 0.0
  %411 = vadd.xlane.f32.xlu0 %v410
  %v412 = vpop.xlane.xlu0 %411
  %v413 = vsel %vm365, %v395, 0.0
  %414 = vadd.xlane.f32.xlu0 %v413
  %v415 = vpop.xlane.xlu0 %414
  %v416 = vsel %vm365, %v396, 0.0
  %417 = vadd.xlane.f32.xlu0 %v416
  %v418 = vpop.xlane.xlu0 %417
  %v419 = vsel %vm365, %v397, 0.0
  %420 = vadd.xlane.f32.xlu0 %v419
  %v421 = vpop.xlane.xlu0 %420
  %v422 = vsel %vm365, %v357, 0.0
  %423 = vadd.xlane.f32.xlu0 %v422
  %v424 = vpop.xlane.xlu0 %423
  %v425 = vsel %vm365, %v358, 0.0
  %426 = vadd.xlane.f32.xlu0 %v425
  %v427 = vpop.xlane.xlu0 %426
  %v428 = vsel %vm365, %v359, 0.0
  %429 = vadd.xlane.f32.xlu0 %v428
  %v430 = vpop.xlane.xlu0 %429
  %v431 = vsel %vm365, %v360, 0.0
  %432 = vadd.xlane.f32.xlu0 %v431
  %v433 = vpop.xlane.xlu0 %432
  %v434 = vsel %vm365, %v361, 0.0
  %435 = vadd.xlane.f32.xlu0 %v434
  %v436 = vpop.xlane.xlu0 %435
  %v437 = vsel %vm365, %v362, 0.0
  %438 = vadd.xlane.f32.xlu0 %v437
  %v439 = vpop.xlane.xlu0 %438
  %v440 = vsel %vm365, %v363, 0.0
  %441 = vadd.xlane.f32.xlu0 %v440
  %v442 = vpop.xlane.xlu0 %441
  %v443 = vsel %vm365, %v364, 0.0
  %444 = vadd.xlane.f32.xlu0 %v443
  %v445 = vpop.xlane.xlu0 %444
  %v446 = vsub.f32 64.0, %v424
  %v447 = vsub.f32 64.0, %v427
  %v448 = vsub.f32 64.0, %v430
  %v449 = vsub.f32 64.0, %v433
  %v450 = vsub.f32 64.0, %v436
  %v451 = vsub.f32 64.0, %v439
  %v452 = vsub.f32 64.0, %v442
  %v453 = vsub.f32 64.0, %v445
  %v454 = vsub.f32 %v368, %v400
  %v455 = vsub.f32 %v371, %v403
  %v456 = vsub.f32 %v374, %v406
  %v457 = vsub.f32 %v377, %v409
  %v458 = vsub.f32 %v380, %v412
  %v459 = vsub.f32 %v383, %v415
  %v460 = vsub.f32 %v386, %v418
  %v461 = vsub.f32 %v389, %v421
  %v462 = vsub.f32 %v424, 1.0
  %v463 = vsub.f32 %v427, 1.0
  %v464 = vsub.f32 %v430, 1.0
  %v465 = vsub.f32 %v433, 1.0
  %v466 = vsub.f32 %v436, 1.0
  %v467 = vsub.f32 %v439, 1.0
  %v468 = vsub.f32 %v442, 1.0
  %v469 = vsub.f32 %v445, 1.0
  %v470 = vmul.f32 %v446, 10.0
  %v471 = vmul.f32 %v447, 10.0
  %v472 = vmul.f32 %v448, 10.0
  %v473 = vmul.f32 %v449, 10.0
  %v474 = vmul.f32 %v450, 10.0
  %v475 = vmul.f32 %v451, 10.0
  %v476 = vmul.f32 %v452, 10.0
  %v477 = vmul.f32 %v453, 10.0
  %v478 = vsub.f32 %v470, %v454
  %v479 = vsub.f32 %v471, %v455
  %v480 = vsub.f32 %v472, %v456
  %v481 = vsub.f32 %v473, %v457
  %v482 = vsub.f32 %v474, %v458
  %v483 = vsub.f32 %v475, %v459
  %v484 = vsub.f32 %v476, %v460
  %v485 = vsub.f32 %v477, %v461
  %v486 = vmax.f32 %v478, 0.0
  %v487 = vmax.f32 %v479, 0.0
  %v488 = vmax.f32 %v480, 0.0
  %v489 = vmax.f32 %v481, 0.0
  %v490 = vmax.f32 %v482, 0.0
  %v491 = vmax.f32 %v483, 0.0
  %v492 = vmax.f32 %v484, 0.0
  %v493 = vmax.f32 %v485, 0.0
  %v494 = vmul.f32 %v462, 10.0
  %v495 = vmul.f32 %v463, 10.0
  %v496 = vmul.f32 %v464, 10.0
  %v497 = vmul.f32 %v465, 10.0
  %v498 = vmul.f32 %v466, 10.0
  %v499 = vmul.f32 %v467, 10.0
  %v500 = vmul.f32 %v468, 10.0
  %v501 = vmul.f32 %v469, 10.0
  %v502 = vsub.f32 %v400, %v494
  %v503 = vsub.f32 %v403, %v495
  %v504 = vsub.f32 %v406, %v496
  %v505 = vsub.f32 %v409, %v497
  %v506 = vsub.f32 %v412, %v498
  %v507 = vsub.f32 %v415, %v499
  %v508 = vsub.f32 %v418, %v500
  %v509 = vsub.f32 %v421, %v501
  %v510 = vmax.f32 %v502, 0.0
  %v511 = vmax.f32 %v503, 0.0
  %v512 = vmax.f32 %v504, 0.0
  %v513 = vmax.f32 %v505, 0.0
  %v514 = vmax.f32 %v506, 0.0
  %v515 = vmax.f32 %v507, 0.0
  %v516 = vmax.f32 %v508, 0.0
  %v517 = vmax.f32 %v509, 0.0
  %v518 = vadd.f32 %v486, %v510
  %v519 = vadd.f32 %v487, %v511
  %v520 = vadd.f32 %v488, %v512
  %v521 = vadd.f32 %v489, %v513
  %v522 = vadd.f32 %v490, %v514
  %v523 = vadd.f32 %v491, %v515
  %v524 = vadd.f32 %v492, %v516
  %v525 = vadd.f32 %v493, %v517
  %vm526 = vcmask 7168
  %527 = vst.msk [vmem:[%s8] sm:$0xff] %vm526, %v518
  %528 = vst.msk [vmem:[%s8 + $0x8] sm:$0xff] %vm526, %v519
  %529 = vst.msk [vmem:[%s8 + $0x10] sm:$0xff] %vm526, %v520
  %530 = vst.msk [vmem:[%s8 + $0x18] sm:$0xff] %vm526, %v521
  %531 = vst.msk [vmem:[%s8 + $0x20] sm:$0xff] %vm526, %v522
  %532 = vst.msk [vmem:[%s8 + $0x28] sm:$0xff] %vm526, %v523
  %533 = vst.msk [vmem:[%s8 + $0x30] sm:$0xff] %vm526, %v524
  %534 = vst.msk [vmem:[%s8 + $0x38] sm:$0xff] %vm526, %v525
  // Predicated region
  $region34: #{tpu_custom_call.1} parent=0 // pred_check
    _
  $region35: #{tpu_custom_call.1} parent=0 // pred_check_branch
    %536 = sbr.rel (0) target = $region37
  $region36: #{tpu_custom_call.1} parent=0 // pred_region
    _
  $region37: #{tpu_custom_call.1} parent=0 // pred_fallthru
    _
  // Predicated region
  $region38: #{tpu_custom_call.1} parent=0 // pred_check
    _
  $region39: #{tpu_custom_call.1} parent=0 // pred_check_branch
    %538 = sbr.rel (0) target = $region41
  $region40: #{tpu_custom_call.1} parent=0 // pred_region
    _
  $region41: #{tpu_custom_call.1} parent=0 // pred_fallthru
    _

</llo_original>
